<compile_context>
chip_gen: v6e
topology: v6e:2x2x1
jax: 0.10.0
libtpu: 0.0.40
codegen_flags: <defaults>
</compile_context>

<pallas_src>
import functools

import jax
import jax.numpy as jnp
from jax import lax
from jax.experimental import pallas as pl
from jax.experimental.pallas import tpu as pltpu

BN_EPS = 1e-5


def _round_up(x, m):
    return ((x + m - 1) // m) * m


# ----------------- Phase 1: matmul + per-channel batch statistics -----------
def _matmul_stats_kernel(p_ref, w_ref, y_ref, sum_ref, sq_ref):
    # p_ref: (K, TM) patch tile, w_ref: (Cout, K) weights (resident),
    # y_ref: (Cout, TM) pre-BN output tile,
    # sum_ref / sq_ref: (Cout, 1) accumulators resident across the M grid axis.
    @pl.when(pl.program_id(0) == 0)
    def _():
        sum_ref[...] = jnp.zeros_like(sum_ref)
        sq_ref[...] = jnp.zeros_like(sq_ref)

    y = jnp.dot(w_ref[...], p_ref[...], preferred_element_type=jnp.float32)
    sum_ref[...] += jnp.sum(y, axis=-1, keepdims=True)
    sq_ref[...] += jnp.sum(y * y, axis=-1, keepdims=True)
    y_ref[...] = y


# ----------------- Phase 2: BN affine + ReLU (lane-dense, parallel) ---------
def _bn_relu_kernel(y_ref, sum_ref, sq_ref, g_ref, b_ref, o_ref, *, inv_count):
    mean = sum_ref[...] * inv_count                        # (Cout, 1)
    var = jnp.maximum(sq_ref[...] * inv_count - mean * mean, 0.0)
    inv_std = lax.rsqrt(var + BN_EPS)
    scale = inv_std * g_ref[...]                           # (Cout, 1)
    shift = b_ref[...] - mean * scale                      # (Cout, 1)
    out = y_ref[...] * scale + shift                       # (Cout, TM)
    o_ref[...] = jnp.maximum(out, 0.0).astype(o_ref.dtype)


def down_transition(x, conv_w, conv_b, bn_gamma, bn_beta, *, tile_m=512):
    """Conv3d(k=2, s=2, bias) + BatchNorm3d(batch stats) + ReLU on NCDHW input.

    `conv_b` is accepted for parameter parity with the PyTorch module but is
    not added in-kernel: a per-channel bias cancels exactly under the BN mean
    subtraction that follows, so the forward output is unchanged.
    """
    del conv_b  # mathematically a no-op under the subsequent BN mean-subtract
    N, Cin, D, H, W = x.shape
    Cout = conv_w.shape[0]
    Do, Ho, Wo = D // 2, H // 2, W // 2
    M = N * Do * Ho * Wo
    K = Cin * 8

    # Lane-dense orientation: (K, M) patch matrix, M on the lane axis.
    patches = x.reshape(N, Cin, Do, 2, Ho, 2, Wo, 2)
    patches = patches.transpose(1, 3, 5, 7, 0, 2, 4, 6).reshape(K, M)
    w_mat = conv_w.reshape(Cout, K).astype(jnp.float32)

    tm = min(tile_m, _round_up(M, 128))
    mp = _round_up(M, tm)
    if mp != M:
        # Zero-padded columns contribute exactly 0 to sum / sum-of-squares
        # (no bias is added in-kernel), so dividing by the true M keeps the
        # batch statistics exact.
        patches = jnp.pad(patches, ((0, 0), (0, mp - M)))
    n_tiles = mp // tm

    # Phase 1: tiled matmul + resident per-channel stat accumulators.
    y, ssum, ssq = pl.pallas_call(
        _matmul_stats_kernel,
        out_shape=(
            jax.ShapeDtypeStruct((Cout, mp), jnp.float32),
            jax.ShapeDtypeStruct((Cout, 1), jnp.float32),
            jax.ShapeDtypeStruct((Cout, 1), jnp.float32),
        ),
        grid=(n_tiles,),
        in_specs=[
            pl.BlockSpec((K, tm), lambda i: (0, i)),        # patch tile
            pl.BlockSpec((Cout, K), lambda i: (0, 0)),      # weights (resident)
        ],
        out_specs=(
            pl.BlockSpec((Cout, tm), lambda i: (0, i)),     # pre-BN y tile
            pl.BlockSpec((Cout, 1), lambda i: (0, 0)),      # sum accumulator
            pl.BlockSpec((Cout, 1), lambda i: (0, 0)),      # sumsq accumulator
        ),
        compiler_params=pltpu.CompilerParams(
            dimension_semantics=("arbitrary",)),
    )(patches.astype(jnp.float32), w_mat)

    # Phase 2: normalize + affine + ReLU, in place over the y buffer.
    kernel2 = functools.partial(_bn_relu_kernel, inv_count=1.0 / M)
    out_cm = pl.pallas_call(
        kernel2,
        out_shape=jax.ShapeDtypeStruct((Cout, mp), jnp.float32),
        grid=(n_tiles,),
        in_specs=[
            pl.BlockSpec((Cout, tm), lambda i: (0, i)),     # y tile
            pl.BlockSpec((Cout, 1), lambda i: (0, 0)),      # sum
            pl.BlockSpec((Cout, 1), lambda i: (0, 0)),      # sumsq
            pl.BlockSpec((Cout, 1), lambda i: (0, 0)),      # gamma
            pl.BlockSpec((Cout, 1), lambda i: (0, 0)),      # beta
        ],
        out_specs=pl.BlockSpec((Cout, tm), lambda i: (0, i)),
        input_output_aliases={0: 0},                        # reuse y buffer
        compiler_params=pltpu.CompilerParams(
            dimension_semantics=("parallel",)),             # megacore on v7x
    )(
        y,
        ssum,
        ssq,
        bn_gamma.reshape(Cout, 1).astype(jnp.float32),
        bn_beta.reshape(Cout, 1).astype(jnp.float32),
    )

    # Back to NCDHW.
    out = out_cm[:, :M].reshape(Cout, N, Do, Ho, Wo).transpose(1, 0, 2, 3, 4)
    return out.astype(x.dtype)


def _reference(x, conv_w, conv_b, bn_gamma, bn_beta):
    """Pure-JAX reference: Conv3d(k=2,s=2)+bias -> BN(batch stats) -> ReLU."""
    y = lax.conv_general_dilated(
        x, conv_w, window_strides=(2, 2, 2), padding="VALID",
        dimension_numbers=("NCDHW", "OIDHW", "NCDHW"))
    y = y + conv_b.reshape(1, -1, 1, 1, 1)
    mean = jnp.mean(y, axis=(0, 2, 3, 4), keepdims=True)
    var = jnp.mean((y - mean) ** 2, axis=(0, 2, 3, 4), keepdims=True)
    yn = (y - mean) * lax.rsqrt(var + BN_EPS)
    yn = yn * bn_gamma.reshape(1, -1, 1, 1, 1) + bn_beta.reshape(1, -1, 1, 1, 1)
    return jnp.maximum(yn, 0.0)


if __name__ == "__main__":
    key = jax.random.PRNGKey(0)
    k_x, k_w, k_b = jax.random.split(key, 3)

    N, Cin, Cout = 2, 4, 8
    D = H = W = 8

    x = jax.random.normal(k_x, (N, Cin, D, H, W), dtype=jnp.float32)

    fan_in = Cin * 2 * 2 * 2
    bound = 1.0 / (fan_in ** 0.5)
    conv_w = jax.random.uniform(
        k_w, (Cout, Cin, 2, 2, 2), minval=-bound, maxval=bound, dtype=jnp.float32
    )
    conv_b = jax.random.uniform(
        k_b, (Cout,), minval=-bound, maxval=bound, dtype=jnp.float32
    )
    bn_gamma = jnp.ones((Cout,), dtype=jnp.float32)   # BatchNorm3d default weight
    bn_beta = jnp.zeros((Cout,), dtype=jnp.float32)   # BatchNorm3d default bias

    out = down_transition(x, conv_w, conv_b, bn_gamma, bn_beta)
    jax.block_until_ready(out)
    assert out.shape == (N, Cout, D // 2, H // 2, W // 2)

    ref = _reference(x, conv_w, conv_b, bn_gamma, bn_beta)
    jax.block_until_ready(ref)
    assert bool(jnp.allclose(out, ref, atol=1e-4, rtol=1e-4)), "mismatch vs reference"

    print("KERNEL_OK")
</pallas_src>

<mosaic_0001>
module attributes {stable_mosaic.version = 11 : i64} {
  func.func @_matmul_stats_kernel(%arg0: i32, %arg1: memref<32x128xf32, #tpu.memory_space<vmem>>, %arg2: memref<8x32xf32, #tpu.memory_space<vmem>>, %arg3: memref<8x128xf32, #tpu.memory_space<vmem>>, %arg4: memref<8x1xf32, #tpu.memory_space<vmem>>, %arg5: memref<8x1xf32, #tpu.memory_space<vmem>>) attributes {dimension_semantics = [#tpu.dimension_semantics<arbitrary>], iteration_bounds = array<i64: 1>, scalar_prefetch = 0 : i64, scratch_operands = 0 : i64, tpu.core_type = #tpu.core_type<tc>, window_params = [{transform_indices = @transform_0, window_bounds = array<i64: 32, 128>}, {pipeline_mode = #tpu.pipeline_mode<synchronous>, transform_indices = @transform_1, window_bounds = array<i64: 8, 32>}, {transform_indices = @transform_2, window_bounds = array<i64: 8, 128>}, {pipeline_mode = #tpu.pipeline_mode<synchronous>, transform_indices = @transform_3, window_bounds = array<i64: 8, 1>}, {pipeline_mode = #tpu.pipeline_mode<synchronous>, transform_indices = @transform_4, window_bounds = array<i64: 8, 1>}]} {
    %c0_i32 = arith.constant 0 : i32
    %0 = arith.cmpi eq, %arg0, %c0_i32 : i32
    %1 = arith.extui %0 : i1 to i32
    %c0_i32_0 = arith.constant 0 : i32
    %2 = arith.cmpi ne, %1, %c0_i32_0 : i32
    scf.if %2 {
      %cst_16 = arith.constant 0.000000e+00 : f32
      %18 = vector.broadcast %cst_16 : f32 to vector<8x1xf32>
      %c0_17 = arith.constant 0 : index
      %c0_18 = arith.constant 0 : index
      %19 = vector.load %arg4[%c0_17, %c0_18] : memref<8x1xf32, #tpu.memory_space<vmem>>, vector<8x1xf32>
      tpu.vector_store %arg4[%c0_17, %c0_18], %18 {strides = array<i32>} : memref<8x1xf32, #tpu.memory_space<vmem>>, vector<8x1xf32>,
      %cst_19 = arith.constant 0.000000e+00 : f32
      %20 = vector.broadcast %cst_19 : f32 to vector<8x1xf32>
      %c0_20 = arith.constant 0 : index
      %c0_21 = arith.constant 0 : index
      %21 = vector.load %arg5[%c0_20, %c0_21] : memref<8x1xf32, #tpu.memory_space<vmem>>, vector<8x1xf32>
      tpu.vector_store %arg5[%c0_20, %c0_21], %20 {strides = array<i32>} : memref<8x1xf32, #tpu.memory_space<vmem>>, vector<8x1xf32>,
    } else {
    }
    %c0 = arith.constant 0 : index
    %c0_1 = arith.constant 0 : index
    %3 = vector.load %arg2[%c0, %c0_1] : memref<8x32xf32, #tpu.memory_space<vmem>>, vector<8x32xf32>
    %c0_2 = arith.constant 0 : index
    %c0_3 = arith.constant 0 : index
    %4 = vector.load %arg1[%c0_2, %c0_3] : memref<32x128xf32, #tpu.memory_space<vmem>>, vector<32x128xf32>
    %cst = arith.constant dense<0.000000e+00> : vector<8x128xf32>
    %5 = tpu.matmul %3, %4, %cst {dimension_numbers = #tpu.dot_dimension_numbers<[1], [0], [0], [1], [0, 0, 1, 1], [], []>} : vector<8x32xf32>, vector<32x128xf32>, vector<8x128xf32> -> vector<8x128xf32>
    %c0_4 = arith.constant 0 : index
    %c0_5 = arith.constant 0 : index
    %6 = vector.load %arg4[%c0_4, %c0_5] : memref<8x1xf32, #tpu.memory_space<vmem>>, vector<8x1xf32>
    %cst_6 = arith.constant dense<0.000000e+00> : vector<8xf32>
    %7 = vector.multi_reduction <add>, %5, %cst_6 [1] : vector<8x128xf32> to vector<8xf32>
    %8 = vector.shape_cast %7 : vector<8xf32> to vector<8x1xf32>
    %9 = arith.addf %6, %8 : vector<8x1xf32>
    %c0_7 = arith.constant 0 : index
    %c0_8 = arith.constant 0 : index
    %10 = vector.load %arg4[%c0_7, %c0_8] : memref<8x1xf32, #tpu.memory_space<vmem>>, vector<8x1xf32>
    tpu.vector_store %arg4[%c0_7, %c0_8], %9 {strides = array<i32>} : memref<8x1xf32, #tpu.memory_space<vmem>>, vector<8x1xf32>,
    %c0_9 = arith.constant 0 : index
    %c0_10 = arith.constant 0 : index
    %11 = vector.load %arg5[%c0_9, %c0_10] : memref<8x1xf32, #tpu.memory_space<vmem>>, vector<8x1xf32>
    %12 = arith.mulf %5, %5 : vector<8x128xf32>
    %cst_11 = arith.constant dense<0.000000e+00> : vector<8xf32>
    %13 = vector.multi_reduction <add>, %12, %cst_11 [1] : vector<8x128xf32> to vector<8xf32>
    %14 = vector.shape_cast %13 : vector<8xf32> to vector<8x1xf32>
    %15 = arith.addf %11, %14 : vector<8x1xf32>
    %c0_12 = arith.constant 0 : index
    %c0_13 = arith.constant 0 : index
    %16 = vector.load %arg5[%c0_12, %c0_13] : memref<8x1xf32, #tpu.memory_space<vmem>>, vector<8x1xf32>
    tpu.vector_store %arg5[%c0_12, %c0_13], %15 {strides = array<i32>} : memref<8x1xf32, #tpu.memory_space<vmem>>, vector<8x1xf32>,
    %c0_14 = arith.constant 0 : index
    %c0_15 = arith.constant 0 : index
    %17 = vector.load %arg3[%c0_14, %c0_15] : memref<8x128xf32, #tpu.memory_space<vmem>>, vector<8x128xf32>
    tpu.vector_store %arg3[%c0_14, %c0_15], %5 {strides = array<i32>} : memref<8x128xf32, #tpu.memory_space<vmem>>, vector<8x128xf32>,
    return
  }
  func.func @transform_0(%arg0: i32) -> (i32, i32) {
    %c0_i32 = arith.constant 0 : i32
    %c0_i32_0 = arith.constant 0 : i32
    return %c0_i32, %arg0 : i32, i32
  }
  func.func @transform_1(%arg0: i32) -> (i32, i32) {
    %c0_i32 = arith.constant 0 : i32
    %c0_i32_0 = arith.constant 0 : i32
    %c0_i32_1 = arith.constant 0 : i32
    return %c0_i32, %c0_i32_0 : i32, i32
  }
  func.func @transform_2(%arg0: i32) -> (i32, i32) {
    %c0_i32 = arith.constant 0 : i32
    %c0_i32_0 = arith.constant 0 : i32
    return %c0_i32, %arg0 : i32, i32
  }
  func.func @transform_3(%arg0: i32) -> (i32, i32) {
    %c0_i32 = arith.constant 0 : i32
    %c0_i32_0 = arith.constant 0 : i32
    %c0_i32_1 = arith.constant 0 : i32
    return %c0_i32, %c0_i32_0 : i32, i32
  }
  func.func @transform_4(%arg0: i32) -> (i32, i32) {
    %c0_i32 = arith.constant 0 : i32
    %c0_i32_0 = arith.constant 0 : i32
    %c0_i32_1 = arith.constant 0 : i32
    return %c0_i32, %c0_i32_0 : i32, i32
  }
}

</mosaic_0001>

<llo_original>
// kernel: tpu_custom_call.1
$region0: #{tpu_custom_call.1}
  #allocation0 [shape = 'u32[]', space=smem, size = 0x4, offset = 0x4, fixed_abs, tag = 'smem constant byte address 0x4 - core index']
  #allocation1 [shape = 'u32[144,128]{1,0:T(1,128)}', space=vmem, size = 0x12000, scoped, tag = 'internal scratch']
  %s0 = inlined_call_operand.hbm [shape: f32[32,128], index: 0, kind: input, shape index: {}]
  %s1 = inlined_call_operand.hbm [shape: f32[8,32], index: 1, kind: input, shape index: {}]
  %s2 = inlined_call_operand.hbm [shape: f32[8,128], index: 2, kind: output, shape index: {0}]
  %s3 = inlined_call_operand.vmem [shape: f32[8,1], index: 3, kind: output, shape index: {1}]
  %s4 = inlined_call_operand.vmem [shape: f32[8,1], index: 4, kind: output, shape index: {2}]
  %5 = xla_tuple %s2, %s3, %s4
  %s6 = sld [smem:[#allocation0]]
  $region46: #{tpu_custom_call.1} parent=0
    _
  %s8 = ssub.s32 1, %s6
  %s9 = scalar_select 0, %s8, %s6
  $region1: #{tpu_custom_call.1} parent=0
    #allocation2 [shape = 'u8[16384]{0}', space=vmem, size = 0x4000, scoped, tag = 'input window, operand 0, single buffered']
    #allocation3 [shape = 's32[1]{0}', space=sflag, size = 0x4, scoped, tag = 'scoped memory for tpu_custom_call.1']
    #allocation4 [shape = 's32[1]{0}', space=sflag, size = 0x4, scoped, tag = 'scoped memory for tpu_custom_call.1']
    #allocation5 [shape = 'u8[4096]{0}', space=vmem, size = 0x1000, scoped, tag = 'input window, operand 1, single buffered']
    #allocation6 [shape = 's32[1]{0}', space=sflag, size = 0x4, scoped, tag = 'scoped memory for tpu_custom_call.1']
    #allocation7 [shape = 'u8[4096]{0}', space=vmem, size = 0x1000, scoped, tag = 'output window, operand 0, single buffered']
    %10 = vsyncpa [#allocation3], 0
    %11 = vsyncpa [#allocation6], 0
    %12 = vsyncpa [#allocation4], 0
    // Predicated region
    $region2: #{tpu_custom_call.1} parent=1 // pred_check
      _
    $region3: #{tpu_custom_call.1} parent=1 // pred_check_branch
      %14 = sbr.rel (0) target = $region5
    $region4: #{tpu_custom_call.1} parent=1 // pred_region
      %s16 = ssub.s32 512, 512
      %17 = vsyncadd [#allocation3], %s16
      %s18 = sshll.u32 [#allocation2], 4
      %s19 = int_to_ptr.vmem [resolvable:$true] %s18
      %24 = dma.hbm_to_vmem [thread:$0]  %s0, 512, %s19, [#allocation3], 128, 128, 8
    $region5: #{tpu_custom_call.1} parent=1 // pred_fallthru
      _
    // Predicated region
    $region6: #{tpu_custom_call.1} parent=1 // pred_check
      _
    $region7: #{tpu_custom_call.1} parent=1 // pred_check_branch
      %26 = sbr.rel (0) target = $region9
    $region8: #{tpu_custom_call.1} parent=1 // pred_region
      %s28 = ssub.s32 128, 128
      %29 = vsyncadd [#allocation6], %s28
      %s31 = sshll.u32 [#allocation5], 4
      %s32 = int_to_ptr.vmem [resolvable:$true] %s31
      %34 = dma.hbm_to_vmem [thread:$0]  %s1, 128, %s32, [#allocation6]
    $region9: #{tpu_custom_call.1} parent=1 // pred_fallthru
      _
    // Predicated region
    $region10: #{tpu_custom_call.1} parent=1 // pred_check
      _
    $region11: #{tpu_custom_call.1} parent=1 // pred_check_branch
      %36 = sbr.rel (0) target = $region13
    $region12: #{tpu_custom_call.1} parent=1 // pred_region
      %37 = dma.done [#allocation3], 512
    $region13: #{tpu_custom_call.1} parent=1 // pred_fallthru
      _
    // Predicated region
    $region14: #{tpu_custom_call.1} parent=1 // pred_check
      _
    $region15: #{tpu_custom_call.1} parent=1 // pred_check_branch
      %39 = sbr.rel (0) target = $region17
    $region16: #{tpu_custom_call.1} parent=1 // pred_region
      %40 = dma.done [#allocation6], 128
    $region17: #{tpu_custom_call.1} parent=1 // pred_fallthru
      _
    %p41 = scmp.eq.s32.totalorder 0, 0
    // Predicated region
    $region18: #{tpu_custom_call.1} parent=1 // pred_check
      %p42 = pneg %p41
    $region19: #{tpu_custom_call.1} parent=1 // pred_check_branch
      %44 = sbr.rel (%p42) target = $region21
    $region20: #{tpu_custom_call.1} parent=1 // pred_region
      %vm45 = vcmask 7168
      %46 = vst.msk [vmem:[%s3] sm:$0xff] %vm45, 0.0
      %47 = vst.msk [vmem:[%s4] sm:$0xff] %vm45, 0.0
    $region21: #{tpu_custom_call.1} parent=1 // pred_fallthru
      _
    %v48 = vld [vmem:[#allocation5] sm:$0xff]
    %v49 = vld [vmem:[#allocation2] sm:$0xff]
    %v50 = vld [vmem:[#allocation2 + $0x8] sm:$0xff]
    %v51 = vld [vmem:[#allocation2 + $0x10] sm:$0xff]
    %v52 = vld [vmem:[#allocation2 + $0x18] sm:$0xff]
    %vm53 = vcmask 261120
    %v55 = vsel %vm53, %v48, 0
    %57 = vmatprep.subr.mxu0 0.0
    %58 = vmatpush1.msra.mxu0 0.0
    %59 = vmatprep.subr.mxu0 0.0
    %60 = vmatpush1.msra.mxu0 0.0
    %61 = vmatprep.subr.mxu0 0.0
    %62 = vmatpush1.msra.mxu0 0.0
    %63 = vmatprep.subr.mxu0 0.0
    %64 = vmatpush1.msra.mxu0 0.0
    %65 = vmatprep.subr.mxu0 0.0
    %66 = vmatpush1.msra.mxu0 0.0
    %67 = vmatprep.subr.mxu0 0.0
    %68 = vmatpush1.msra.mxu0 0.0
    %69 = vmatprep.subr.mxu0 0.0
    %70 = vmatpush1.msra.mxu0 0.0
    %71 = vmatprep.subr.mxu0 0.0
    %72 = vmatpush1.msra.mxu0 0.0
    %73 = vmatprep.subr.mxu0 0.0
    %74 = vmatpush1.msra.mxu0 0.0
    %75 = vmatprep.subr.mxu0 0.0
    %76 = vmatpush1.msra.mxu0 0.0
    %77 = vmatprep.subr.mxu0 0.0
    %78 = vmatpush1.msra.mxu0 0.0
    %79 = vmatprep.subr.mxu0 0.0
    %80 = vmatpush1.msra.mxu0 0.0
    %81 = vmatprep.subr.mxu0 0.0
    %82 = vmatpush1.msra.mxu0 %v52
    %83 = vmatprep.subr.mxu0 0.0
    %84 = vmatpush1.msra.mxu0 %v51
    %85 = vmatprep.subr.mxu0 0.0
    %86 = vmatpush1.msra.mxu0 %v50
    %87 = vmatprep.subr.mxu0 0.0
    %88 = vmatpush1.msra.mxu0 %v49
    %89 = vmatprep.subr.mxu0 0.0
    %90 = vmatpush2.msra.mxu0 0.0
    %91 = vmatprep.subr.mxu0 0.0
    %92 = vmatpush2.msra.mxu0 0.0
    %93 = vmatprep.subr.mxu0 0.0
    %94 = vmatpush2.msra.mxu0 0.0
    %95 = vmatprep.subr.mxu0 0.0
    %96 = vmatpush2.msra.mxu0 0.0
    %97 = vmatprep.subr.mxu0 0.0
    %98 = vmatpush2.msra.mxu0 0.0
    %99 = vmatprep.subr.mxu0 0.0
    %100 = vmatpush2.msra.mxu0 0.0
    %101 = vmatprep.subr.mxu0 0.0
    %102 = vmatpush2.msra.mxu0 0.0
    %103 = vmatprep.subr.mxu0 0.0
    %104 = vmatpush2.msra.mxu0 0.0
    %105 = vmatprep.subr.mxu0 0.0
    %106 = vmatpush2.msra.mxu0 0.0
    %107 = vmatprep.subr.mxu0 0.0
    %108 = vmatpush2.msra.mxu0 0.0
    %109 = vmatprep.subr.mxu0 0.0
    %110 = vmatpush2.msra.mxu0 0.0
    %111 = vmatprep.subr.mxu0 0.0
    %112 = vmatpush2.msra.mxu0 0.0
    %113 = vmatprep.subr.mxu0 0.0
    %114 = vmatpush2.msra.mxu0 0.0
    %115 = vmatprep.subr.mxu0 0.0
    %116 = vmatpush2.msra.mxu0 0.0
    %117 = vmatprep.subr.mxu0 0.0
    %118 = vmatpush2.msra.mxu0 0.0
    %119 = vmatprep.subr.mxu0 0.0
    %120 = vmatpush2.msra.mxu0 0.0
    %121 = vmatprep.mubr.f32.mxu0 0.0
    %122 = vmatmul.mubr.f32.gmra.mxu0 %v55
    %v123 = vpop.f32.mrf.mxu0
    %v124 = vadd.f32 0.0, %v123
    %v125 = vpop.f32.mrf.mxu0
    %126 = vdwg.mxu0
    %v127 = vld [vmem:[%s3] sm:$0xff]
    %128 = vadd.xlane.f32.xlu0 %v124
    %v129 = vpop.xlane.xlu0 %128
    %v130 = vadd.f32 %v127, %v129
    %vm131 = vcmask 7168
    %132 = vst.msk [vmem:[%s3] sm:$0xff] %vm131, %v130
    %v133 = vld [vmem:[%s4] sm:$0xff]
    %v134 = vmul.f32 %v124, %v124
    %135 = vadd.xlane.f32.xlu0 %v134
    %v136 = vpop.xlane.xlu0 %135
    %v137 = vadd.f32 %v133, %v136
    %138 = vst.msk [vmem:[%s4] sm:$0xff] %vm131, %v137
    %139 = vst [vmem:[#allocation7] sm:$0xff] %v124
    // Predicated region
    $region22: #{tpu_custom_call.1} parent=1 // pred_check
      _
    $region23: #{tpu_custom_call.1} parent=1 // pred_check_branch
      %141 = sbr.rel (0) target = $region25
    $region24: #{tpu_custom_call.1} parent=1 // pred_region
      %s143 = ssub.s32 128, 128
      %144 = vsyncadd [#allocation4], %s143
      %s146 = sshll.u32 [#allocation7], 4
      %s147 = int_to_ptr.vmem [resolvable:$true] %s146
      %149 = dma.vmem_to_hbm [thread:$0]  %s147, 128, %s2, [#allocation4]
    $region25: #{tpu_custom_call.1} parent=1 // pred_fallthru
      _
    // Predicated region
    $region26: #{tpu_custom_call.1} parent=1 // pred_check
      _
    $region27: #{tpu_custom_call.1} parent=1 // pred_check_branch
      %151 = sbr.rel (0) target = $region29
    $region28: #{tpu_custom_call.1} parent=1 // pred_region
      _
    $region29: #{tpu_custom_call.1} parent=1 // pred_fallthru
      _
    // Predicated region
    $region30: #{tpu_custom_call.1} parent=1 // pred_check
      _
    $region31: #{tpu_custom_call.1} parent=1 // pred_check_branch
      %153 = sbr.rel (0) target = $region33
    $region32: #{tpu_custom_call.1} parent=1 // pred_region
      _
    $region33: #{tpu_custom_call.1} parent=1 // pred_fallthru
      _
    // Predicated region
    $region34: #{tpu_custom_call.1} parent=1 // pred_check
      _
    $region35: #{tpu_custom_call.1} parent=1 // pred_check_branch
      %155 = sbr.rel (0) target = $region37
    $region36: #{tpu_custom_call.1} parent=1 // pred_region
      %156 = dma.done [#allocation4], 128
    $region37: #{tpu_custom_call.1} parent=1 // pred_fallthru
      _
    // Predicated region
    $region38: #{tpu_custom_call.1} parent=1 // pred_check
      _
    $region39: #{tpu_custom_call.1} parent=1 // pred_check_branch
      %158 = sbr.rel (0) target = $region41
    $region40: #{tpu_custom_call.1} parent=1 // pred_region
      _
    $region41: #{tpu_custom_call.1} parent=1 // pred_fallthru
      _
    // Predicated region
    $region42: #{tpu_custom_call.1} parent=1 // pred_check
      _
    $region43: #{tpu_custom_call.1} parent=1 // pred_check_branch
      %160 = sbr.rel (0) target = $region45
    $region44: #{tpu_custom_call.1} parent=1 // pred_region
      _
    $region45: #{tpu_custom_call.1} parent=1 // pred_fallthru
      _
    %161 = vsyncpa [#allocation3], 1
    %162 = vsyncpa [#allocation6], 1
    %163 = vsyncpa [#allocation4], 1

</llo_original>
